<compile_context>
chip_gen: v7x
topology: tpu7x:2x2x1
jax: 0.10.0
libtpu: 0.0.40
codegen_flags: <defaults>
</compile_context>

<pallas_src>
import functools

import jax
import jax.numpy as jnp
from jax.experimental import pallas as pl
from jax.experimental.pallas import tpu as pltpu


def _binary_attn_bias_kernel(qid_ref, kid_ref, w_ref, out_ref):
    """One (batch, q-tile, kv-tile) step: write the bias for ALL heads.

    qid_ref: (1, TQ, 1)        int32  VMEM
    kid_ref: (1, 1, TKV)       int32  VMEM
    w_ref:   (2, H)            f32    SMEM (whole embedding table)
    out_ref: (1, H, TQ, TKV)   out dtype
    """
    q = qid_ref[0]                         # (TQ, 1)
    k = kid_ref[0]                         # (1, TKV)
    ind = q == k                           # (TQ, TKV) bool — shared by all heads
    num_heads = out_ref.shape[1]
    for h in range(num_heads):             # static unroll; one vselect per head
        w0 = w_ref[0, h]                   # scalar read from SMEM
        w1 = w_ref[1, h]
        out_ref[0, h] = jnp.where(ind, w1, w0).astype(out_ref.dtype)


def _choose_tiles(q_len, kv_len, num_heads, bytes_per_elem,
                  budget_bytes=20 * 1024 * 1024):
    """Pick (TQ, TKV): lane-dense TKV (multiple of 128, or full extent),
    sublane-aligned TQ (multiple of 8, or full extent), shrunk until the
    double-buffered head-fused output block fits the VMEM budget."""
    tkv = next((c for c in (2048, 1024, 512, 256, 128) if kv_len % c == 0), kv_len)
    tq = next((c for c in (1024, 512, 256, 128, 64, 32, 16, 8) if q_len % c == 0), q_len)

    def footprint(tq_, tkv_):
        return 2 * num_heads * tq_ * tkv_ * bytes_per_elem  # 2x: double buffering

    while footprint(tq, tkv) > budget_bytes and tq > 8 and q_len % (tq // 2) == 0:
        tq //= 2
    while footprint(tq, tkv) > budget_bytes and tkv > 128 and kv_len % (tkv // 2) == 0:
        tkv //= 2
    return tq, tkv


@functools.partial(jax.jit,
                   static_argnames=("num_heads", "num_groups", "out_dtype"))
def binary_attention_bias(query, key, query_id, kv_id, emb_weight, *,
                          num_heads, num_groups, out_dtype=jnp.float32):
    """Pallas port of BinaryAttentionBias.forward.

    query:      (B, num_groups, hpg, Q, head_dim)   -- unused (interface only)
    key:        (B, num_groups, hpg, KV, head_dim)  -- unused (interface only)
    query_id:   (B, 1, 1, Q)   int
    kv_id:      (B, 1, 1, KV)  int
    emb_weight: (2, num_heads) float32   (nn.Embedding(2, num_heads).weight)

    returns:    (B, 1, num_groups, hpg, Q, KV) out_dtype
    """
    del query, key  # not used by the binary bias
    heads_per_group = num_heads // num_groups

    B = query_id.shape[0]
    Q = query_id.shape[-1]
    KV = kv_id.shape[-1]

    qid = query_id.reshape(B, Q, 1).astype(jnp.int32)    # (B, Q, 1)
    kid = kv_id.reshape(B, 1, KV).astype(jnp.int32)      # (B, 1, KV)
    w = emb_weight.astype(jnp.float32)                   # (2, H) -> SMEM

    tq, tkv = _choose_tiles(Q, KV, num_heads, jnp.dtype(out_dtype).itemsize)
    grid = (B, Q // tq, KV // tkv)                       # kv innermost

    bias = pl.pallas_call(
        _binary_attn_bias_kernel,
        out_shape=jax.ShapeDtypeStruct((B, num_heads, Q, KV), out_dtype),
        grid=grid,
        in_specs=[
            # qid block index is constant across the inner kv axis -> no re-DMA
            pl.BlockSpec((1, tq, 1), lambda b, i, j: (b, i, 0)),
            pl.BlockSpec((1, 1, tkv), lambda b, i, j: (b, 0, j)),
            pl.BlockSpec(memory_space=pltpu.MemorySpace.SMEM),  # whole (2, H) table
        ],
        out_specs=pl.BlockSpec((1, num_heads, tq, tkv),
                               lambda b, i, j: (b, 0, i, j)),
        compiler_params=pltpu.CompilerParams(
            dimension_semantics=("parallel", "parallel", "parallel"),
            vmem_limit_bytes=48 * 1024 * 1024),
    )(qid, kid, w)

    # rearrange "... 1 (group hpg) q kv -> ... group hpg q kv"
    return bias.reshape(B, 1, num_groups, heads_per_group, Q, KV)


def _reference(query_id, kv_id, emb_weight, num_heads, num_groups):
    """Pure-JAX reference mirroring the torch implementation."""
    hpg = num_heads // num_groups
    ind = query_id[..., :, None] == kv_id[..., None, :]        # (B,1,1,Q,KV)
    w = emb_weight.reshape(2, num_heads, 1, 1)                 # (2,H,1,1)
    bias = (~ind) * w[:1] + ind * w[1:]                        # (B,1,H,Q,KV)
    B = bias.shape[0]
    Q, KV = bias.shape[-2:]
    return bias.reshape(B, 1, num_groups, hpg, Q, KV)


if __name__ == "__main__":
    # Small shapes consistent with the module: dim=32, num_heads=4, num_groups=2
    dim, num_heads, num_groups = 32, 4, 2
    head_dim = dim // num_heads
    hpg = num_heads // num_groups
    B, Q, KV = 2, 8, 16

    key0 = jax.random.PRNGKey(0)
    k_q, k_k, k_qid, k_kid, k_w = jax.random.split(key0, 5)

    query = jax.random.normal(k_q, (B, num_groups, hpg, Q, head_dim), jnp.float32)
    key_t = jax.random.normal(k_k, (B, num_groups, hpg, KV, head_dim), jnp.float32)
    query_id = jax.random.randint(k_qid, (B, 1, 1, Q), 0, 3, jnp.int32)
    kv_id = jax.random.randint(k_kid, (B, 1, 1, KV), 0, 3, jnp.int32)
    # nn.Embedding(2, num_heads) default init is N(0, 1); deterministic here.
    emb_weight = jax.random.normal(k_w, (2, num_heads), jnp.float32)

    out = binary_attention_bias(query, key_t, query_id, kv_id, emb_weight,
                                num_heads=num_heads, num_groups=num_groups)
    out = jax.block_until_ready(out)

    ref = _reference(query_id, kv_id, emb_weight, num_heads, num_groups)
    assert out.shape == (B, 1, num_groups, hpg, Q, KV), out.shape
    assert jnp.array_equal(out, ref), "mismatch vs reference"

    print("KERNEL_OK")
</pallas_src>

<mosaic_0001>
module attributes {stable_mosaic.version = 11 : i64} {
  func.func @_binary_attn_bias_kernel(%arg0: i32, %arg1: i32, %arg2: i32, %arg3: memref<1x8x1xi32, #tpu.memory_space<vmem>>, %arg4: memref<1x1x16xi32, #tpu.memory_space<vmem>>, %arg5: memref<2x4xf32, #tpu.memory_space<smem>>, %arg6: memref<1x4x8x16xf32, #tpu.memory_space<vmem>>) attributes {dimension_semantics = [#tpu.dimension_semantics<parallel>, #tpu.dimension_semantics<parallel>, #tpu.dimension_semantics<parallel>], iteration_bounds = array<i64: 2, 1, 1>, scalar_prefetch = 0 : i64, scratch_operands = 0 : i64, tpu.core_type = #tpu.core_type<tc>, window_params = [{transform_indices = @transform_0, window_bounds = array<i64: 1, 8, 1>}, {transform_indices = @transform_1, window_bounds = array<i64: 1, 1, 16>}, {transform_indices = @transform_2, window_bounds = array<i64: 2, 4>}, {transform_indices = @transform_3, window_bounds = array<i64: 1, 4, 8, 16>}]} {
    %c0 = arith.constant 0 : index
    %c0_0 = arith.constant 0 : index
    %c0_1 = arith.constant 0 : index
    %0 = vector.load %arg3[%c0, %c0_0, %c0_1] : memref<1x8x1xi32, #tpu.memory_space<vmem>>, vector<1x8x1xi32>
    %1 = vector.shape_cast %0 : vector<1x8x1xi32> to vector<8x1xi32>
    %c0_2 = arith.constant 0 : index
    %c0_3 = arith.constant 0 : index
    %c0_4 = arith.constant 0 : index
    %2 = vector.load %arg4[%c0_2, %c0_3, %c0_4] : memref<1x1x16xi32, #tpu.memory_space<vmem>>, vector<1x1x16xi32>
    %3 = vector.shape_cast %2 : vector<1x1x16xi32> to vector<1x16xi32>
    %4 = vector.broadcast %1 : vector<8x1xi32> to vector<8x16xi32>
    %5 = vector.broadcast %3 : vector<1x16xi32> to vector<8x16xi32>
    %6 = arith.cmpi eq, %4, %5 : vector<8x16xi32>
    %c0_5 = arith.constant 0 : index
    %c0_6 = arith.constant 0 : index
    %7 = memref.load %arg5[%c0_5, %c0_6] : memref<2x4xf32, #tpu.memory_space<smem>>
    %c1 = arith.constant 1 : index
    %c0_7 = arith.constant 0 : index
    %8 = memref.load %arg5[%c1, %c0_7] : memref<2x4xf32, #tpu.memory_space<smem>>
    %9 = vector.broadcast %8 : f32 to vector<8x16xf32>
    %10 = vector.broadcast %7 : f32 to vector<8x16xf32>
    %11 = arith.select %6, %9, %10 : vector<8x16xi1>, vector<8x16xf32>
    %c0_8 = arith.constant 0 : index
    %c0_9 = arith.constant 0 : index
    %c0_10 = arith.constant 0 : index
    %c0_11 = arith.constant 0 : index
    %12 = vector.load %arg6[%c0_8, %c0_9, %c0_10, %c0_11] : memref<1x4x8x16xf32, #tpu.memory_space<vmem>>, vector<1x1x8x16xf32>
    %13 = vector.shape_cast %12 : vector<1x1x8x16xf32> to vector<8x16xf32>
    %14 = vector.shape_cast %11 : vector<8x16xf32> to vector<1x1x8x16xf32>
    tpu.vector_store %arg6[%c0_8, %c0_9, %c0_10, %c0_11], %14 {strides = array<i32>} : memref<1x4x8x16xf32, #tpu.memory_space<vmem>>, vector<1x1x8x16xf32>,
    %c0_12 = arith.constant 0 : index
    %c1_13 = arith.constant 1 : index
    %15 = memref.load %arg5[%c0_12, %c1_13] : memref<2x4xf32, #tpu.memory_space<smem>>
    %c1_14 = arith.constant 1 : index
    %c1_15 = arith.constant 1 : index
    %16 = memref.load %arg5[%c1_14, %c1_15] : memref<2x4xf32, #tpu.memory_space<smem>>
    %17 = vector.broadcast %16 : f32 to vector<8x16xf32>
    %18 = vector.broadcast %15 : f32 to vector<8x16xf32>
    %19 = arith.select %6, %17, %18 : vector<8x16xi1>, vector<8x16xf32>
    %c0_16 = arith.constant 0 : index
    %c1_17 = arith.constant 1 : index
    %c0_18 = arith.constant 0 : index
    %c0_19 = arith.constant 0 : index
    %20 = vector.load %arg6[%c0_16, %c1_17, %c0_18, %c0_19] : memref<1x4x8x16xf32, #tpu.memory_space<vmem>>, vector<1x1x8x16xf32>
    %21 = vector.shape_cast %20 : vector<1x1x8x16xf32> to vector<8x16xf32>
    %22 = vector.shape_cast %19 : vector<8x16xf32> to vector<1x1x8x16xf32>
    tpu.vector_store %arg6[%c0_16, %c1_17, %c0_18, %c0_19], %22 {strides = array<i32>} : memref<1x4x8x16xf32, #tpu.memory_space<vmem>>, vector<1x1x8x16xf32>,
    %c0_20 = arith.constant 0 : index
    %c2 = arith.constant 2 : index
    %23 = memref.load %arg5[%c0_20, %c2] : memref<2x4xf32, #tpu.memory_space<smem>>
    %c1_21 = arith.constant 1 : index
    %c2_22 = arith.constant 2 : index
    %24 = memref.load %arg5[%c1_21, %c2_22] : memref<2x4xf32, #tpu.memory_space<smem>>
    %25 = vector.broadcast %24 : f32 to vector<8x16xf32>
    %26 = vector.broadcast %23 : f32 to vector<8x16xf32>
    %27 = arith.select %6, %25, %26 : vector<8x16xi1>, vector<8x16xf32>
    %c0_23 = arith.constant 0 : index
    %c2_24 = arith.constant 2 : index
    %c0_25 = arith.constant 0 : index
    %c0_26 = arith.constant 0 : index
    %28 = vector.load %arg6[%c0_23, %c2_24, %c0_25, %c0_26] : memref<1x4x8x16xf32, #tpu.memory_space<vmem>>, vector<1x1x8x16xf32>
    %29 = vector.shape_cast %28 : vector<1x1x8x16xf32> to vector<8x16xf32>
    %30 = vector.shape_cast %27 : vector<8x16xf32> to vector<1x1x8x16xf32>
    tpu.vector_store %arg6[%c0_23, %c2_24, %c0_25, %c0_26], %30 {strides = array<i32>} : memref<1x4x8x16xf32, #tpu.memory_space<vmem>>, vector<1x1x8x16xf32>,
    %c0_27 = arith.constant 0 : index
    %c3 = arith.constant 3 : index
    %31 = memref.load %arg5[%c0_27, %c3] : memref<2x4xf32, #tpu.memory_space<smem>>
    %c1_28 = arith.constant 1 : index
    %c3_29 = arith.constant 3 : index
    %32 = memref.load %arg5[%c1_28, %c3_29] : memref<2x4xf32, #tpu.memory_space<smem>>
    %33 = vector.broadcast %32 : f32 to vector<8x16xf32>
    %34 = vector.broadcast %31 : f32 to vector<8x16xf32>
    %35 = arith.select %6, %33, %34 : vector<8x16xi1>, vector<8x16xf32>
    %c0_30 = arith.constant 0 : index
    %c3_31 = arith.constant 3 : index
    %c0_32 = arith.constant 0 : index
    %c0_33 = arith.constant 0 : index
    %36 = vector.load %arg6[%c0_30, %c3_31, %c0_32, %c0_33] : memref<1x4x8x16xf32, #tpu.memory_space<vmem>>, vector<1x1x8x16xf32>
    %37 = vector.shape_cast %36 : vector<1x1x8x16xf32> to vector<8x16xf32>
    %38 = vector.shape_cast %35 : vector<8x16xf32> to vector<1x1x8x16xf32>
    tpu.vector_store %arg6[%c0_30, %c3_31, %c0_32, %c0_33], %38 {strides = array<i32>} : memref<1x4x8x16xf32, #tpu.memory_space<vmem>>, vector<1x1x8x16xf32>,
    return
  }
  func.func @transform_0(%arg0: i32, %arg1: i32, %arg2: i32) -> (i32, i32, i32) {
    %c0_i32 = arith.constant 0 : i32
    %c0_i32_0 = arith.constant 0 : i32
    return %arg0, %arg1, %c0_i32 : i32, i32, i32
  }
  func.func @transform_1(%arg0: i32, %arg1: i32, %arg2: i32) -> (i32, i32, i32) {
    %c0_i32 = arith.constant 0 : i32
    %c0_i32_0 = arith.constant 0 : i32
    return %arg0, %c0_i32, %arg2 : i32, i32, i32
  }
  func.func @transform_2(%arg0: i32, %arg1: i32, %arg2: i32) -> (i32, i32) {
    %c0_i32 = arith.constant 0 : i32
    %c0_i32_0 = arith.constant 0 : i32
    %c0_i32_1 = arith.constant 0 : i32
    return %c0_i32, %c0_i32_0 : i32, i32
  }
  func.func @transform_3(%arg0: i32, %arg1: i32, %arg2: i32) -> (i32, i32, i32, i32) {
    %c0_i32 = arith.constant 0 : i32
    %c0_i32_0 = arith.constant 0 : i32
    return %arg0, %c0_i32, %arg1, %arg2 : i32, i32, i32, i32
  }
}

</mosaic_0001>

<llo_original>
// kernel: binary_attention_bias.1
$region0: #{binary_attention_bias.1}
  #allocation0 [shape = 'u32[]', space=smem, size = 0x4, offset = 0x4, fixed_abs, tag = 'smem constant byte address 0x4 - core index']
  #allocation1 [shape = 'u32[144,128]{1,0:T(1,128)}', space=vmem, size = 0x12000, scoped, tag = 'internal scratch']
  %s0 = inlined_call_operand.vmem [shape: s32[2,8,1], index: 0, kind: input, shape index: {}]
  %s1 = inlined_call_operand.vmem [shape: s32[2,1,16], index: 1, kind: input, shape index: {}]
  %s2 = inlined_call_operand.vmem [shape: f32[2,4], index: 2, kind: input, shape index: {}]
  %s3 = inlined_call_operand.hbm [shape: f32[2,4,8,16], index: 3, kind: output, shape index: {}]
  %s4 = sld [smem:[#allocation0]]
  $region49: #{binary_attention_bias.1} parent=0
    _
  %s6 = ssub.s32 1, %s4
  %s7 = scalar_select 0, %s6, %s4
  $region1: #{binary_attention_bias.1} parent=0
    #allocation2 [shape = 'u8[1024]{0}', space=smem, size = 0x400, scoped, tag = 'input window, operand 2, single buffered']
    #allocation3 [shape = 's32[2]{0}', space=sflag, size = 0x8, scoped, tag = 'scoped memory for binary_attention_bias.1']
    #allocation4 [shape = 's32[2]{0}', space=sflag, size = 0x8, scoped, tag = 'scoped memory for binary_attention_bias.1']
    #allocation5 [shape = 'u8[32768]{0}', space=vmem, size = 0x8000, scoped, tag = 'output window, operand 0']
    %8 = vsyncpa [#allocation4], 0
    %9 = vsyncpa [#allocation3], 0
    %s10 = scalar_lea.sflag [#allocation3], 1
    %11 = vsyncpa %s10, 0
    loop: start=0, step=1, limit=4
    $region2: #{binary_attention_bias.1} parent=1 // loop_pre_header
      _
    $region3: #{binary_attention_bias.1} parent=1 // loop_header
      %s13 = sphi 0, %s17
      %p14 = scmp.ge.s32.totalorder %s13, 4
      %s20 = sphi 0, %s39
      %s21 = sphi 0, %s35
      %s22 = sphi 0, %s31
      %s23 = sphi 0, %s20
      %s24 = sphi 0, %s21
      %s25 = sphi 0, %s22
      %s26 = sphi 0, %s23
      %s27 = sphi 0, %s24
      %s28 = sphi 0, %s25
      %s44 = sphi 0, %s46
      %s47 = sphi 0, %s44
      %s48 = sphi 0, %s47
      %s64 = sphi 0, %s48
      %s72 = sphi 0, %s74
      %s75 = sphi 0, %s72
      %s76 = sphi 0, %s75
      %s92 = sphi 0, %s76
      %s96 = sphi 0, %s96
      %s98 = sphi 0, %s96
      %s99 = sphi 0, %s98
      %s113 = sphi 0, %s99
      %s123 = sphi 0, %s125
      %s126 = sphi 0, %s123
      %s127 = sphi 0, %s126
      %s143 = sphi 0, %s127
    $region4: #{binary_attention_bias.1} parent=1 // loop_header_branch
      %16 = sbr.rel (%p14) target = $region8
    $region5: #{binary_attention_bias.1} parent=1 // loop_body
      %s18 = ssub.s32 %s13, 1
      %s19 = ssub.s32 %s13, 2
      %s29 = sadd.s32 1, %s22
      %p30 = scmp.ge.s32.totalorder %s29, 1
      %s31 = scalar_select %p30, 0, %s29
      %s32 = sadd.s32 1, %s21
      %s33 = scalar_select %p30, %s32, %s21
      %p34 = scmp.ge.s32.totalorder %s33, 1
      %s35 = scalar_select %p34, 0, %s33
      %s36 = sadd.s32 1, %s20
      %s37 = scalar_select %p34, %s36, %s20
      %p38 = scmp.ge.s32.totalorder %s37, 2
      %s39 = scalar_select %p38, 0, %s37
      %s40 = ssub.s32 %s20, %s39
      %s41 = ssub.s32 %s21, %s35
      %s42 = sor.u32 %s40, %s41
      %p43 = scmp.eq.s32.totalorder %s42, 0
      %s45 = sadd.s32 %s44, 1
      %s46 = scalar_select %p43, %s44, %s45
      %p49 = pneg %p43
      %p50 = scmp.eq.s32.totalorder %s13, 1
      %p51 = por %p49, %p50
      %p52 = scmp.ne.s32.totalorder %s44, %s47
      %p53 = scmp.eq.s32.totalorder %s13, 0
      %p54 = por %p52, %p53
      %p55 = scmp.ne.s32.totalorder %s44, %s47
      %p56 = scmp.eq.s32.totalorder %s18, 1
      %p57 = por %p55, %p56
      %p58 = scmp.ne.s32.totalorder %s47, %s48
      %p59 = scmp.eq.s32.totalorder %s18, 0
      %p60 = por %p58, %p59
      %p61 = scmp.ne.s32.totalorder %s47, %s48
      %p62 = scmp.eq.s32.totalorder %s19, 1
      %p63 = por %p61, %p62
      %p65 = scmp.ne.s32.totalorder %s48, %s64
      %p66 = scmp.eq.s32.totalorder %s19, 0
      %p67 = por %p65, %p66
      %s68 = ssub.s32 %s20, %s39
      %s69 = ssub.s32 %s22, %s31
      %s70 = sor.u32 %s68, %s69
      %p71 = scmp.eq.s32.totalorder %s70, 0
      %s73 = sadd.s32 %s72, 1
      %s74 = scalar_select %p71, %s72, %s73
      %p77 = pneg %p71
      %p78 = scmp.eq.s32.totalorder %s13, 1
      %p79 = por %p77, %p78
      %p80 = scmp.ne.s32.totalorder %s72, %s75
      %p81 = scmp.eq.s32.totalorder %s13, 0
      %p82 = por %p80, %p81
      %p83 = scmp.ne.s32.totalorder %s72, %s75
      %p84 = scmp.eq.s32.totalorder %s18, 1
      %p85 = por %p83, %p84
      %p86 = scmp.ne.s32.totalorder %s75, %s76
      %p87 = scmp.eq.s32.totalorder %s18, 0
      %p88 = por %p86, %p87
      %p89 = scmp.ne.s32.totalorder %s75, %s76
      %p90 = scmp.eq.s32.totalorder %s19, 1
      %p91 = por %p89, %p90
      %p93 = scmp.ne.s32.totalorder %s76, %s92
      %p94 = scmp.eq.s32.totalorder %s19, 0
      %p95 = por %p93, %p94
      %s97 = sadd.s32 %s96, 1
      %p100 = scmp.eq.s32.totalorder %s13, 1
      %p101 = scmp.ne.s32.totalorder %s96, %s98
      %p102 = scmp.eq.s32.totalorder %s13, 0
      %p103 = por %p101, %p102
      %p104 = scmp.ne.s32.totalorder %s96, %s98
      %p105 = scmp.eq.s32.totalorder %s18, 1
      %p106 = por %p104, %p105
      %p107 = scmp.ne.s32.totalorder %s98, %s99
      %p108 = scmp.eq.s32.totalorder %s18, 0
      %p109 = por %p107, %p108
      %p110 = scmp.ne.s32.totalorder %s98, %s99
      %p111 = scmp.eq.s32.totalorder %s19, 1
      %p112 = por %p110, %p111
      %p114 = scmp.ne.s32.totalorder %s99, %s113
      %p115 = scmp.eq.s32.totalorder %s19, 0
      %p116 = por %p114, %p115
      %s117 = ssub.s32 %s20, %s39
      %s118 = ssub.s32 %s21, %s35
      %s119 = sor.u32 %s117, %s118
      %s120 = ssub.s32 %s22, %s31
      %s121 = sor.u32 %s119, %s120
      %p122 = scmp.eq.s32.totalorder %s121, 0
      %s124 = sadd.s32 %s123, 1
      %s125 = scalar_select %p122, %s123, %s124
      %p128 = pneg %p122
      %p129 = scmp.eq.s32.totalorder %s13, 1
      %p130 = por %p128, %p129
      %p131 = scmp.ne.s32.totalorder %s123, %s126
      %p132 = scmp.eq.s32.totalorder %s13, 0
      %p133 = por %p131, %p132
      %p134 = scmp.ne.s32.totalorder %s123, %s126
      %p135 = scmp.eq.s32.totalorder %s18, 1
      %p136 = por %p134, %p135
      %p137 = scmp.ne.s32.totalorder %s126, %s127
      %p138 = scmp.eq.s32.totalorder %s18, 0
      %p139 = por %p137, %p138
      %p140 = scmp.ne.s32.totalorder %s126, %s127
      %p141 = scmp.eq.s32.totalorder %s19, 1
      %p142 = por %p140, %p141
      %p144 = scmp.ne.s32.totalorder %s127, %s143
      %p145 = scmp.eq.s32.totalorder %s19, 0
      %p146 = por %p144, %p145
      %p147 = scmp.le.s32.totalorder 1, %s13
      %p148 = scmp.lt.s32.totalorder %s13, 3
      %p149 = pnand %p147, %p148
      %p150 = pneg %p149
      // Predicated region
      $region9: #{binary_attention_bias.1} parent=5 // pred_check
        _
      $region10: #{binary_attention_bias.1} parent=5 // pred_check_branch
        %152 = sbr.rel (%p149) target = $region12
      $region11: #{binary_attention_bias.1} parent=5 // pred_region
        %s153 = ssub.s32 %s13, 1
        // Predicated region
        $region13: #{binary_attention_bias.1} parent=11 // pred_check
          %p154 = pneg %p109
        $region14: #{binary_attention_bias.1} parent=11 // pred_check_branch
          %156 = sbr.rel (%p154) target = $region16
        $region15: #{binary_attention_bias.1} parent=11 // pred_region
          %s158 = ssub.s32 32, 32
          %159 = vsyncadd [#allocation4], %s158
          %s161 = sshll.u32 %s2, 4
          %s162 = int_to_ptr.vmem [resolvable:$true] %s161
          %164 = dma.vmem_to_smem %s162, 32, [#allocation2], [#allocation4]
        $region16: #{binary_attention_bias.1} parent=11 // pred_fallthru
          _
      $region12: #{binary_attention_bias.1} parent=5 // pred_fallthru
        _
      %p165 = scmp.lt.s32.totalorder %s13, 2
      // Predicated region
      $region17: #{binary_attention_bias.1} parent=5 // pred_check
        %p166 = pneg %p165
      $region18: #{binary_attention_bias.1} parent=5 // pred_check_branch
        %168 = sbr.rel (%p166) target = $region20
      $region19: #{binary_attention_bias.1} parent=5 // pred_region
        // Predicated region
        $region21: #{binary_attention_bias.1} parent=19 // pred_check
          %p169 = pneg %p54
        $region22: #{binary_attention_bias.1} parent=19 // pred_check_branch
          %171 = sbr.rel (%p169) target = $region24
        $region23: #{binary_attention_bias.1} parent=19 // pred_region
          %p172 = scmp.lt.s32.totalorder %s20, 1
          %s173 = scalar_select %p172, %s20, 1
          %p174 = scmp.lt.s32.totalorder %s21, 0
          %s175 = scalar_select %p174, %s21, 0
          %s176 = sadd.s32 %s175, %s173
          %s177 = smul.addr %s176, 8
          %s178 = scalar_lea.vmem %s0, %s177
        $region24: #{binary_attention_bias.1} parent=19 // pred_fallthru
          _
        // Predicated region
        $region25: #{binary_attention_bias.1} parent=19 // pred_check
          %p179 = pneg %p82
        $region26: #{binary_attention_bias.1} parent=19 // pred_check_branch
          %181 = sbr.rel (%p179) target = $region28
        $region27: #{binary_attention_bias.1} parent=19 // pred_region
          %p182 = scmp.lt.s32.totalorder %s20, 1
          %s183 = scalar_select %p182, %s20, 1
          %p184 = scmp.lt.s32.totalorder %s22, 0
          %s185 = scalar_select %p184, %s22, 0
          %s186 = sadd.s32 %s185, %s183
          %s187 = scalar_lea.vmem %s1, %s186
        $region28: #{binary_attention_bias.1} parent=19 // pred_fallthru
          _
      $region20: #{binary_attention_bias.1} parent=5 // pred_fallthru
        _
      %p188 = scmp.le.s32.totalorder 1, %s13
      %p189 = scmp.lt.s32.totalorder %s13, 3
      %p190 = pnand %p188, %p189
      %p191 = pneg %p190
      // Predicated region
      $region29: #{binary_attention_bias.1} parent=5 // pred_check
        _
      $region30: #{binary_attention_bias.1} parent=5 // pred_check_branch
        %193 = sbr.rel (%p190) target = $region32
      $region31: #{binary_attention_bias.1} parent=5 // pred_region
        %s194 = ssub.s32 %s13, 1
        // Predicated region
        $region33: #{binary_attention_bias.1} parent=31 // pred_check
          %p195 = pneg %p109
        $region34: #{binary_attention_bias.1} parent=31 // pred_check_branch
          %197 = sbr.rel (%p195) target = $region36
        $region35: #{binary_attention_bias.1} parent=31 // pred_region
          %198 = dma.done [#allocation4], 32
        $region36: #{binary_attention_bias.1} parent=31 // pred_fallthru
          _
        %199 = sfence
        %p200 = scmp.lt.s32.totalorder %s23, 1
        %s201 = scalar_select %p200, %s23, 1
        %p202 = scmp.lt.s32.totalorder %s24, 0
        %s203 = scalar_select %p202, %s24, 0
        %s204 = sadd.s32 %s203, %s201
        %s205 = smul.addr %s204, 8
        %s206 = scalar_lea.vmem %s0, %s205
        %p207 = pneg %p60
        %p208 = pneg %p57
        %p209 = scmp.lt.s32.totalorder %s23, 1
        %s210 = scalar_select %p209, %s23, 1
        %p211 = scmp.lt.s32.totalorder %s25, 0
        %s212 = scalar_select %p211, %s25, 0
        %s213 = sadd.s32 %s212, %s210
        %s214 = scalar_lea.vmem %s1, %s213
        %p215 = pneg %p88
        %p216 = pneg %p85
        %p217 = pneg %p109
        %p218 = pneg %p106
        %p219 = pneg %p139
        %p220 = pneg %p136
        %s221 = sand.u32 %s126, 1
        %s222 = scalar_lea.sflag [#allocation3], %s221
        %s223 = sand.u32 %s126, 1
        %s224 = smul.addr %s223, 32
        %s225 = scalar_lea.vmem [#allocation5], %s224
        %p226 = scmp.lt.s32.totalorder %s23, 1
        %s227 = scalar_select %p226, %s23, 1
        %p228 = scmp.lt.s32.totalorder %s24, 0
        %s229 = scalar_select %p228, %s24, 0
        %s230 = sadd.s32 %s229, %s227
        %s231 = smul.addr %s230, 8
        %s232 = scalar_lea.vmem %s0, %s231
        %p233 = scmp.lt.s32.totalorder %s23, 1
        %s234 = scalar_select %p233, %s23, 1
        %p235 = scmp.lt.s32.totalorder %s25, 0
        %s236 = scalar_select %p235, %s25, 0
        %s237 = sadd.s32 %s236, %s234
        %s238 = scalar_lea.vmem %s1, %s237
        %v239 = vld [vmem:[%s232] sm:$0xff]
        %v240 = vld [vmem:[%s238] sm:$0x1]
        %241 = vset.pattern.permute.xlu0 0
        %242 = vperm.xlu0 %241, %v239
        %v243 = vpop.permute.xlu0 %242
        %v244 = vlaneseq
        %v245 = vshrl.u32 %v244, 7
        %v246 = vsub.s32 0, %v245
        %v247 = vrot.slane %v240, %v246
        %vm248 = vcmp.eq.s32.totalorder %v243, %v247
        %s249 = sld [smem:[#allocation2]]
        %s250 = sld [smem:[#allocation2 + $0x80]]
        %v251 = vstv %s250
        %v252 = vstv %s249
        %v253 = vsel %vm248, %v251, %v252
        %vm254 = vcmask 130048
        %255 = vst.msk [vmem:[%s225] sm:$0xff] %vm254, %v253
        %s256 = sld [smem:[#allocation2 + $0x1]]
        %s257 = sld [smem:[#allocation2 + $0x81]]
        %v258 = vstv %s257
        %v259 = vstv %s256
        %v260 = vsel %vm248, %v258, %v259
        %s261 = scalar_lea.vmem %s225, 8 [#allocation5]
        %262 = vst.msk [vmem:[%s261] sm:$0xff] %vm254, %v260
        %s263 = sld [smem:[#allocation2 + $0x2]]
        %s264 = sld [smem:[#allocation2 + $0x82]]
        %v265 = vstv %s264
        %v266 = vstv %s263
        %v267 = vsel %vm248, %v265, %v266
        %s268 = scalar_lea.vmem %s225, 16 [#allocation5]
        %269 = vst.msk [vmem:[%s268] sm:$0xff] %vm254, %v267
        %s270 = sld [smem:[#allocation2 + $0x3]]
        %s271 = sld [smem:[#allocation2 + $0x83]]
        %v272 = vstv %s271
        %v273 = vstv %s270
        %v274 = vsel %vm248, %v272, %v273
        %s275 = scalar_lea.vmem %s225, 24 [#allocation5]
        %276 = vst.msk [vmem:[%s275] sm:$0xff] %vm254, %v274
        %s277 = sand.u32 %s126, 1
        %s278 = scalar_lea.sflag [#allocation3], %s277
        %s279 = sand.u32 %s126, 1
        %s280 = smul.addr %s279, 32
        %s281 = scalar_lea.vmem [#allocation5], %s280
        // Predicated region
        $region37: #{binary_attention_bias.1} parent=31 // pred_check
          %p282 = pneg %p136
        $region38: #{binary_attention_bias.1} parent=31 // pred_check_branch
          %284 = sbr.rel (%p282) target = $region40
        $region39: #{binary_attention_bias.1} parent=31 // pred_region
          %s286 = ssub.s32 512, 512
          %287 = vsyncadd %s278, %s286
          %s288 = sadd.s32 %s25, %s24
          %s289 = smul.addr %s23, 4
          %s290 = sadd.s32 %s288, %s289
          %s291 = smul.addr %s290, 128
          %s292 = scalar_lea.hbm %s3, %s291
          %s293 = sshll.u32 %s281, 4
          %s294 = int_to_ptr.vmem [resolvable:$true] %s293
          %299 = dma.vmem_to_hbm [thread:$0]  %s294, 512, %s292, %s278, 128, 128, 8
        $region40: #{binary_attention_bias.1} parent=31 // pred_fallthru
          _
      $region32: #{binary_attention_bias.1} parent=5 // pred_fallthru
        _
      %p300 = scmp.le.s32.totalorder 2, %s13
      // Predicated region
      $region41: #{binary_attention_bias.1} parent=5 // pred_check
        %p301 = pneg %p300
      $region42: #{binary_attention_bias.1} parent=5 // pred_check_branch
        %303 = sbr.rel (%p301) target = $region44
      $region43: #{binary_attention_bias.1} parent=5 // pred_region
        %s304 = ssub.s32 %s13, 2
        // Predicated region
        $region45: #{binary_attention_bias.1} parent=43 // pred_check
          %p305 = pneg %p142
        $region46: #{binary_attention_bias.1} parent=43 // pred_check_branch
          %307 = sbr.rel (%p305) target = $region48
        $region47: #{binary_attention_bias.1} parent=43 // pred_region
          %s308 = sand.u32 %s127, 1
          %s309 = scalar_lea.sflag [#allocation3], %s308
          %s310 = sand.u32 %s127, 1
          %s311 = smul.addr %s310, 32
          %s312 = scalar_lea.vmem [#allocation5], %s311
          %313 = dma.done %s309, 512
        $region48: #{binary_attention_bias.1} parent=43 // pred_fallthru
          _
      $region44: #{binary_attention_bias.1} parent=5 // pred_fallthru
        _
    $region6: #{binary_attention_bias.1} parent=1 // loop_footer
      %s17 = sadd.s32 1, %s13
    $region7: #{binary_attention_bias.1} parent=1 // loop_footer_branch
      %12 = sbr.rel target = $region3
    $region8: #{binary_attention_bias.1} parent=1 // loop_exit
      _
    %314 = vsyncpa [#allocation3], 1
    %s315 = scalar_lea.sflag [#allocation3], 1
    %316 = vsyncpa %s315, 1
    %317 = vsyncpa [#allocation4], 1
    %s318 = scalar_lea.sflag [#allocation4], 1
    %319 = vsyncpa %s318, 1

</llo_original>
